<compile_context>
chip_gen: v7x
topology: tpu7x:2x2x1
jax: 0.10.0
libtpu: 0.0.40
codegen_flags: <defaults>
</compile_context>

<pallas_src>
import functools

import jax
import jax.numpy as jnp
from jax.experimental import pallas as pl
from jax.experimental.pallas import tpu as pltpu

NEG_INF = -10000000000.0          # Python float -> jaxpr literal, not a const


def _round_up(x, m):
    return ((x + m - 1) // m) * m


# ----------------------------------------------------------------------------
# Pallas kernel: attention + scoring head, one batch chunk per grid step
# ----------------------------------------------------------------------------
def _wcp_head_kernel(wn_ref, wh_ref, l_n_ref, l_hs_ref,
                     w_in_ref, w_out_ref, bias_ref, out_ref,
                     *, b_valid, bc):
    # Skip chunks that are entirely batch padding (only possible when B < G);
    # their (discarded) output rows keep whatever is in the VMEM buffer.
    @pl.when(pl.program_id(0) * bc < b_valid)
    def _():
        nq = wn_ref[...]                       # (BC, Ln_p, HP)   question enc
        hs = wh_ref[...]                       # (BC, Lhs_p, HP)  header enc
        BC, Lhs_p, HP = hs.shape
        Ln_p = nq.shape[1]
        OP = out_ref.shape[-1]
        w_dtype = w_in_ref.dtype

        # merged bias row: [b_att | b_hs | b_c | b_out]  (f32, lane-aligned)
        b_att = bias_ref[:, 0:HP]
        b_hs = bias_ref[:, HP:2 * HP]
        b_c = bias_ref[:, 2 * HP:3 * HP]
        b_out = bias_ref[:, 3 * HP:3 * HP + OP]

        # ---- header-side projections: batch fused onto the sublane axis ----
        hs_flat = hs.reshape(BC * Lhs_p, HP)
        # one MXU pass for [W_att | W_hs^T]
        proj = jnp.dot(hs_flat, w_in_ref[:, 0:2 * HP],
                       preferred_element_type=jnp.float32)    # (BC*Lhs_p, 2HP)
        tmp_att = proj[:, 0:HP].reshape(BC, Lhs_p, HP)         # hs @ W_att
        yh = proj[:, HP:2 * HP] + b_hs                         # W_hs(hs)

        # W_att bias contributes a per-header-row constant: hs . b_att
        att_bias = jnp.sum(hs.astype(jnp.float32) * b_att,
                           axis=-1, keepdims=True)

        # ---- attention over question tokens (batched bmm, flash-attn form) --
        att = jax.lax.dot_general(
            tmp_att.astype(nq.dtype), nq,
            dimension_numbers=(((2,), (2,)), ((0,), (0,))),
            preferred_element_type=jnp.float32)                # (BC, Lhs_p, Ln_p)
        att = att + att_bias

        # mask padded question tokens; small iota, broadcast in the compare
        col = jax.lax.broadcasted_iota(jnp.int32, (1, 1, Ln_p), 2)
        att = jnp.where(col < l_n_ref[...], att, NEG_INF)

        # softmax over question axis (PyTorch softmax dim=2), EUP reciprocal
        m = jnp.max(att, axis=-1, keepdims=True)
        e = jnp.exp(att - m)
        inv = pl.reciprocal(jnp.sum(e, axis=-1, keepdims=True), approx=True)
        p = e * inv

        # ---- context + scoring ----------------------------------------------
        c_n = jax.lax.dot_general(
            p.astype(nq.dtype), nq,
            dimension_numbers=(((2,), (1,)), ((0,), (0,))),
            preferred_element_type=jnp.float32)                # (BC, Lhs_p, HP)
        c_flat = c_n.reshape(BC * Lhs_p, HP)
        yc = jnp.dot(c_flat.astype(w_dtype), w_in_ref[:, 2 * HP:3 * HP],
                     preferred_element_type=jnp.float32) + b_c  # W_c(c_n)

        # W_out(tanh(cat([yc, yh]))) without an in-kernel concat: split rows
        s = jnp.dot(jnp.tanh(yc).astype(w_dtype), w_out_ref[0:HP, :],
                    preferred_element_type=jnp.float32)
        s = s + jnp.dot(jnp.tanh(yh).astype(w_dtype), w_out_ref[HP:2 * HP, :],
                        preferred_element_type=jnp.float32)
        s = (s + b_out).reshape(BC, Lhs_p, OP)

        # penalty: mask header rows beyond l_hs
        row = jax.lax.broadcasted_iota(jnp.int32, (1, Lhs_p, 1), 1)
        s = jnp.where(row < l_hs_ref[...], s, NEG_INF)

        out_ref[...] = s.astype(out_ref.dtype)                 # lane-dense store


# ----------------------------------------------------------------------------
# One-time parameter packing (hoisted out of the per-call hot path)
# ----------------------------------------------------------------------------
def pack_wcp_head_params(lin_params, *, use_bf16=True):
    """Pack WCP linear layers into 3 merged, lane-padded operands (done once)."""
    W_att, b_att, W_c, b_c, W_hs, b_hs, W_out, b_out = lin_params
    hS = W_att.shape[0]
    mL_w = W_out.shape[0]                 # 20
    HP = _round_up(hS, 128)               # lane-dense hidden dim
    OP = _round_up(mL_w, 128)             # lane-dense output dim
    f32 = jnp.float32
    act_dtype = jnp.bfloat16 if use_bf16 else f32   # bf16 fine on v5e/v6e/v7x
                                                    # (MXU is bf16-native; all
                                                    # elementwise math stays f32)

    def pad2(w, r, c):
        return jnp.pad(w.astype(f32), ((0, r - w.shape[0]), (0, c - w.shape[1])))

    # input-side: [W_att | W_hs^T | W_c^T]                       (HP, 3*HP)
    w_in = jnp.concatenate(
        [pad2(W_att, HP, HP), pad2(W_hs.T, HP, HP), pad2(W_c.T, HP, HP)],
        axis=1).astype(act_dtype)
    # output linear split over the tanh([yc, yh]) halves          (2*HP, OP)
    w_out_t = W_out.T.astype(f32)                                 # (2*hS, 20)
    w_out_m = jnp.concatenate(
        [pad2(w_out_t[:hS], HP, OP), pad2(w_out_t[hS:], HP, OP)],
        axis=0).astype(act_dtype)
    # merged bias row: [b_att | b_hs | b_c | b_out]  (f32)        (1, 3*HP+OP)
    bias_row = jnp.concatenate([
        jnp.pad(b_att.astype(f32), (0, HP - hS)),
        jnp.pad(b_hs.astype(f32), (0, HP - hS)),
        jnp.pad(b_c.astype(f32), (0, HP - hS)),
        jnp.pad(b_out.astype(f32), (0, OP - mL_w)),
    ]).reshape(1, 3 * HP + OP)

    return dict(w_in=w_in, w_out=w_out_m, bias=bias_row,
                hS=hS, mL_w=mL_w, HP=HP, OP=OP, act_dtype=act_dtype)


def _default_chunks(B, Lhs_p, wn_bytes):
    """Pipeline heuristic: 1 step for tiny batches, else 2-8 chunks, keeping
    the flattened header matmul M = BC*Lhs_p >= 256 (256-wide MXU on v6e/v7x)."""
    if wn_bytes <= (1 << 20):
        return 1                          # per-step overhead (~0.35us) dominates
    g = int(min(8, max(2, wn_bytes // (1 << 20))))
    while g > 1 and (((B + g - 1) // g) * Lhs_p < 256 or g > B):
        g -= 1
    return max(1, g)


def _vmem_limit_bytes(BC, Ln_p, Lhs_p, HP, OP, itemsize):
    act = 2 * BC * (Ln_p + Lhs_p) * HP * itemsize          # double-buffered wn/wh
    out = 2 * BC * Lhs_p * OP * 4                          # double-buffered f32 out
    wgt = 2 * (3 * HP * HP + 2 * HP * OP) * itemsize + 2 * 4 * (3 * HP + OP)
    tmp = 4 * BC * Lhs_p * (2 * Ln_p + 6 * HP + OP)        # f32 in-kernel temporaries
    est = act + out + wgt + tmp + (4 << 20)                # margin
    # keep well under v7x's 64 MiB physical VMEM; never below the 32 MiB default
    return int(min(64 << 20, max(32 << 20, 2 * est)))


def wcp_head_pallas(wenc_n, wenc_hs, l_n, l_hs, packed, *, n_batch_chunks=None):
    """Pallas WCP head.  Returns [B, 20, Lhs] like PyTorch's `.transpose(1,2)`.

    packed: output of pack_wcp_head_params (built once at init).
    n_batch_chunks: None -> auto heuristic; set even values on v7x so the
                    "parallel" grid axis can be split across both TensorCores.
    """
    B, Ln, hS = wenc_n.shape
    _, Lhs, _ = wenc_hs.shape
    assert hS == packed["hS"]
    HP, OP, mL_w = packed["HP"], packed["OP"], packed["mL_w"]
    act_dtype = packed["act_dtype"]
    itemsize = jnp.dtype(act_dtype).itemsize

    Ln_p = _round_up(Ln, 8)               # sublane-aligned question length
    Lhs_p = _round_up(Lhs, 8)             # sublane-aligned header count

    if n_batch_chunks is None:
        G = _default_chunks(B, Lhs_p, B * Ln_p * HP * itemsize)
    else:
        G = max(1, int(n_batch_chunks))
    B_p = _round_up(B, G)
    BC = B_p // G

    # --- zero-padded activations (padding is exact: zeros contribute nothing)
    wn = jnp.pad(wenc_n.astype(act_dtype),
                 ((0, B_p - B), (0, Ln_p - Ln), (0, HP - hS)))
    wh = jnp.pad(wenc_hs.astype(act_dtype),
                 ((0, B_p - B), (0, Lhs_p - Lhs), (0, HP - hS)))

    # lengths as (B_p, 1, 1) int32 so the batch axis can be chunked freely.
    # TODO(synk): an SMEM scalar-prefetch variant would avoid the padded (8,128)
    #   DMA tile per chunk, but the mask needs a per-batch length *vector*,
    #   which SMEM scalar reads cannot supply cheaply; cost here is one tile.
    l_n3 = jnp.pad(jnp.asarray(l_n, jnp.int32), (0, B_p - B)).reshape(B_p, 1, 1)
    l_hs3 = jnp.pad(jnp.asarray(l_hs, jnp.int32), (0, B_p - B)).reshape(B_p, 1, 1)

    kernel = functools.partial(_wcp_head_kernel, b_valid=B, bc=BC)

    out = pl.pallas_call(
        kernel,
        out_shape=jax.ShapeDtypeStruct((B_p, Lhs_p, OP), jnp.float32),
        grid=(G,),
        in_specs=[
            pl.BlockSpec((BC, Ln_p, HP), lambda g: (g, 0, 0)),
            pl.BlockSpec((BC, Lhs_p, HP), lambda g: (g, 0, 0)),
            pl.BlockSpec((BC, 1, 1), lambda g: (g, 0, 0)),
            pl.BlockSpec((BC, 1, 1), lambda g: (g, 0, 0)),
            pl.BlockSpec((HP, 3 * HP), lambda g: (0, 0)),
            pl.BlockSpec((2 * HP, OP), lambda g: (0, 0)),
            pl.BlockSpec((1, 3 * HP + OP), lambda g: (0, 0)),
        ],
        out_specs=pl.BlockSpec((BC, Lhs_p, OP), lambda g: (g, 0, 0)),
        compiler_params=pltpu.CompilerParams(
            dimension_semantics=("parallel",),
            vmem_limit_bytes=_vmem_limit_bytes(BC, Ln_p, Lhs_p, HP, OP, itemsize)),
    )(wn, wh, l_n3, l_hs3, packed["w_in"], packed["w_out"], packed["bias"])

    # strip padding; PyTorch: score.squeeze(2).transpose(1, 2) -> [B, 20, Lhs]
    return jnp.transpose(out[:B, :Lhs, :mL_w], (0, 2, 1))


# ----------------------------------------------------------------------------
# Plain-JAX 2-layer bidirectional LSTM encoders (eval mode, no dropout)
# ----------------------------------------------------------------------------
def lstm_cell(x_t, h, c, Wih, Whh, bih, bhh):
    gates = x_t @ Wih.T + bih + h @ Whh.T + bhh
    i, f, g, o = jnp.split(gates, 4, axis=-1)
    i = jax.nn.sigmoid(i)
    f = jax.nn.sigmoid(f)
    g = jnp.tanh(g)
    o = jax.nn.sigmoid(o)
    c_new = f * c + i * g
    h_new = o * jnp.tanh(c_new)
    return h_new, c_new


def lstm_dir(x, lengths, Wih, Whh, bih, bhh):
    """Forward-direction LSTM with length masking (pack/pad_packed semantics)."""
    B, T, _ = x.shape
    h_dim = Whh.shape[1]

    def step(carry, xt):
        h, c = carry
        x_t, t = xt
        h_new, c_new = lstm_cell(x_t, h, c, Wih, Whh, bih, bhh)
        valid = (t < lengths)[:, None]
        h = jnp.where(valid, h_new, h)
        c = jnp.where(valid, c_new, c)
        out = jnp.where(valid, h_new, 0.0)
        return (h, c), out

    init = (jnp.zeros((B, h_dim), jnp.float32), jnp.zeros((B, h_dim), jnp.float32))
    xs = (jnp.swapaxes(x, 0, 1), jnp.arange(T))
    _, outs = jax.lax.scan(step, init, xs)
    return jnp.swapaxes(outs, 0, 1)


def reverse_within_length(x, lengths):
    T = x.shape[1]
    t = jnp.arange(T)[None, :]
    L = lengths[:, None]
    idx = jnp.where(t < L, L - 1 - t, t)
    return jnp.take_along_axis(x, idx[:, :, None], axis=1)


def bilstm_layer(x, lengths, params_fw, params_bw):
    out_fw = lstm_dir(x, lengths, *params_fw)
    x_rev = reverse_within_length(x, lengths)
    out_bw_rev = lstm_dir(x_rev, lengths, *params_bw)
    out_bw = reverse_within_length(out_bw_rev, lengths)
    return jnp.concatenate([out_fw, out_bw], axis=-1)


def bilstm_encode(x, lengths, layer_params):
    h = x
    for layer in layer_params:
        h = bilstm_layer(h, lengths, layer["fw"], layer["bw"])
    return h


def encode_hpu(wemb_hpu, l_hpu, l_hs, enc_h_params, hS):
    """last_only BiLSTM over each header unit, repacked per batch example."""
    wenc_hpu_all = bilstm_encode(wemb_hpu, jnp.asarray(l_hpu, jnp.int32), enc_h_params)
    n = wemb_hpu.shape[0]
    last = wenc_hpu_all[jnp.arange(n), jnp.asarray(l_hpu) - 1]     # (Nh, hS)
    mL_hs = max(l_hs)
    rows = []
    st = 0
    for lh in l_hs:
        block = last[st:st + lh]
        pad = jnp.zeros((mL_hs - lh, hS), jnp.float32)
        rows.append(jnp.concatenate([block, pad], axis=0))
        st += lh
    return jnp.stack(rows)                                          # (B, mL_hs, hS)


# ----------------------------------------------------------------------------
# Deterministic parameter init (shapes match nn.LSTM / nn.Linear in WCP)
# ----------------------------------------------------------------------------
def init_lstm_params(key, input_size, hidden_size, num_layers):
    params = []
    for layer in range(num_layers):
        in_size = input_size if layer == 0 else 2 * hidden_size
        layer_p = {}
        for direction in ("fw", "bw"):
            key, k1, k2, k3, k4 = jax.random.split(key, 5)
            layer_p[direction] = (
                jax.random.normal(k1, (4 * hidden_size, in_size), jnp.float32) * 0.1,
                jax.random.normal(k2, (4 * hidden_size, hidden_size), jnp.float32) * 0.1,
                jax.random.normal(k3, (4 * hidden_size,), jnp.float32) * 0.1,
                jax.random.normal(k4, (4 * hidden_size,), jnp.float32) * 0.1,
            )
        params.append(layer_p)
    return params, key


def init_linear(key, out_f, in_f):
    k1, k2, key = jax.random.split(key, 3)
    W = jax.random.normal(k1, (out_f, in_f), jnp.float32) * 0.1
    b = jax.random.normal(k2, (out_f,), jnp.float32) * 0.1
    return (W, b), key


# ----------------------------------------------------------------------------
# Pure-JAX reference for the head (correctness check of the Pallas kernel)
# ----------------------------------------------------------------------------
def wcp_head_ref(wenc_n, wenc_hs, l_n, l_hs, lin_params):
    W_att, b_att, W_c, b_c, W_hs, b_hs, W_out, b_out = lin_params
    att = jnp.einsum("bhd,bnd->bhn", wenc_hs, wenc_n @ W_att.T + b_att)
    Ln = wenc_n.shape[1]
    mask_n = jnp.arange(Ln)[None, None, :] < jnp.asarray(l_n)[:, None, None]
    att = jnp.where(mask_n, att, NEG_INF)
    p = jax.nn.softmax(att, axis=2)
    c_n = jnp.einsum("bhn,bnd->bhd", p, wenc_n)
    y = jnp.concatenate([c_n @ W_c.T + b_c, wenc_hs @ W_hs.T + b_hs], axis=2)
    score = jnp.tanh(y) @ W_out.T + b_out
    score = jnp.transpose(score, (0, 2, 1))
    Lhs = wenc_hs.shape[1]
    mask_h = jnp.arange(Lhs)[None, None, :] < jnp.asarray(l_hs)[:, None, None]
    return jnp.where(mask_h, score, NEG_INF)


# ----------------------------------------------------------------------------
if __name__ == "__main__":
    key = jax.random.PRNGKey(0)

    # small shapes consistent with WCP's forward
    B, iS, hS, lS = 2, 16, 32, 2
    mL_w = 20
    Ln = 8                      # max question length
    l_n = [8, 6]                # question lengths
    l_hs = [3, 2]               # number of headers per example
    l_hpu = [2, 3, 4, 1, 2]     # tokens per header unit
    Lhpu = max(l_hpu)
    N_hpu = sum(l_hs)

    key, kn, kh = jax.random.split(key, 3)
    wemb_n = jax.random.normal(kn, (B, Ln, iS), jnp.float32)
    wemb_hpu = jax.random.normal(kh, (N_hpu, Lhpu, iS), jnp.float32)

    # parameters (deterministic, in-script)
    enc_n_params, key = init_lstm_params(key, iS, hS // 2, lS)
    enc_h_params, key = init_lstm_params(key, iS, hS // 2, lS)
    (W_att, b_att), key = init_linear(key, hS, hS)
    (W_c, b_c), key = init_linear(key, hS, hS)
    (W_hs, b_hs), key = init_linear(key, hS, hS)
    (W_out, b_out), key = init_linear(key, mL_w, 2 * hS)
    lin_params = (W_att, b_att, W_c, b_c, W_hs, b_hs, W_out, b_out)

    # one-time weight packing (hoisted out of the per-call hot path)
    packed_bf16 = pack_wcp_head_params(lin_params)                   # default bf16
    packed_f32 = pack_wcp_head_params(lin_params, use_bf16=False)    # strict f32

    # encoders (plain JAX glue)
    wenc_n = bilstm_encode(wemb_n, jnp.asarray(l_n, jnp.int32), enc_n_params)  # (B, Ln, hS)
    wenc_hs = encode_hpu(wemb_hpu, l_hpu, l_hs, enc_h_params, hS)              # (B, mL_hs, hS)

    ref = wcp_head_ref(wenc_n, wenc_hs, l_n, l_hs, lin_params)

    # f32 path (strict numerics; tolerance covers pl.reciprocal(approx=True))
    score_f32 = jax.block_until_ready(
        wcp_head_pallas(wenc_n, wenc_hs, l_n, l_hs, packed_f32))
    assert score_f32.shape == (B, mL_w, max(l_hs)), score_f32.shape
    assert bool(jnp.allclose(score_f32, ref, rtol=1e-2, atol=1e-2)), "mismatch (f32)"

    # bf16 default path (auto chunking -> single fused step at this size)
    score_bf16 = jax.block_until_ready(
        wcp_head_pallas(wenc_n, wenc_hs, l_n, l_hs, packed_bf16))
    assert score_bf16.shape == (B, mL_w, max(l_hs)), score_bf16.shape
    assert bool(jnp.allclose(score_bf16, ref, rtol=2e-2, atol=2e-2)), "mismatch (bf16)"

    # pipelined / megacore-style: 2-way "parallel" batch-chunk grid
    score_chunked = jax.block_until_ready(
        wcp_head_pallas(wenc_n, wenc_hs, l_n, l_hs, packed_bf16, n_batch_chunks=2))
    assert bool(jnp.allclose(score_chunked, ref, rtol=2e-2, atol=2e-2)), "mismatch (chunked)"

    print("KERNEL_OK")
</pallas_src>

<mosaic_0001>
module attributes {stable_mosaic.version = 11 : i64} {
  func.func @_wcp_head_kernel(%arg0: i32, %arg1: memref<2x8x128xf32, #tpu.memory_space<vmem>>, %arg2: memref<2x8x128xf32, #tpu.memory_space<vmem>>, %arg3: memref<2x1x1xi32, #tpu.memory_space<vmem>>, %arg4: memref<2x1x1xi32, #tpu.memory_space<vmem>>, %arg5: memref<128x384xf32, #tpu.memory_space<vmem>>, %arg6: memref<256x128xf32, #tpu.memory_space<vmem>>, %arg7: memref<1x512xf32, #tpu.memory_space<vmem>>, %arg8: memref<2x8x128xf32, #tpu.memory_space<vmem>>) attributes {dimension_semantics = [#tpu.dimension_semantics<parallel>], iteration_bounds = array<i64: 1>, scalar_prefetch = 0 : i64, scratch_operands = 0 : i64, tpu.core_type = #tpu.core_type<tc>, window_params = [{transform_indices = @transform_0, window_bounds = array<i64: 2, 8, 128>}, {transform_indices = @transform_1, window_bounds = array<i64: 2, 8, 128>}, {transform_indices = @transform_2, window_bounds = array<i64: 2, 1, 1>}, {transform_indices = @transform_3, window_bounds = array<i64: 2, 1, 1>}, {pipeline_mode = #tpu.pipeline_mode<synchronous>, transform_indices = @transform_4, window_bounds = array<i64: 128, 384>}, {pipeline_mode = #tpu.pipeline_mode<synchronous>, transform_indices = @transform_5, window_bounds = array<i64: 256, 128>}, {pipeline_mode = #tpu.pipeline_mode<synchronous>, transform_indices = @transform_6, window_bounds = array<i64: 1, 512>}, {transform_indices = @transform_7, window_bounds = array<i64: 2, 8, 128>}]} {
    %c2_i32 = arith.constant 2 : i32
    %0 = arith.muli %arg0, %c2_i32 : i32
    %c2_i32_0 = arith.constant 2 : i32
    %1 = arith.cmpi slt, %0, %c2_i32_0 : i32
    %2 = arith.extui %1 : i1 to i32
    %c0_i32 = arith.constant 0 : i32
    %3 = arith.cmpi ne, %2, %c0_i32 : i32
    scf.if %3 {
      %c0 = arith.constant 0 : index
      %c0_1 = arith.constant 0 : index
      %c0_2 = arith.constant 0 : index
      %4 = vector.load %arg1[%c0, %c0_1, %c0_2] : memref<2x8x128xf32, #tpu.memory_space<vmem>>, vector<2x8x128xf32>
      %c0_3 = arith.constant 0 : index
      %c0_4 = arith.constant 0 : index
      %c0_5 = arith.constant 0 : index
      %5 = vector.load %arg2[%c0_3, %c0_4, %c0_5] : memref<2x8x128xf32, #tpu.memory_space<vmem>>, vector<2x8x128xf32>
      %c0_6 = arith.constant 0 : index
      %c0_7 = arith.constant 0 : index
      %6 = vector.load %arg7[%c0_6, %c0_7] : memref<1x512xf32, #tpu.memory_space<vmem>>, vector<1x128xf32>
      %c0_8 = arith.constant 0 : index
      %c128 = arith.constant 128 : index
      %7 = vector.load %arg7[%c0_8, %c128] : memref<1x512xf32, #tpu.memory_space<vmem>>, vector<1x128xf32>
      %c0_9 = arith.constant 0 : index
      %c256 = arith.constant 256 : index
      %8 = vector.load %arg7[%c0_9, %c256] : memref<1x512xf32, #tpu.memory_space<vmem>>, vector<1x128xf32>
      %c0_10 = arith.constant 0 : index
      %c384 = arith.constant 384 : index
      %9 = vector.load %arg7[%c0_10, %c384] : memref<1x512xf32, #tpu.memory_space<vmem>>, vector<1x128xf32>
      %10 = vector.shape_cast %5 : vector<2x8x128xf32> to vector<16x128xf32>
      %c0_11 = arith.constant 0 : index
      %c0_12 = arith.constant 0 : index
      %11 = vector.load %arg5[%c0_11, %c0_12] : memref<128x384xf32, #tpu.memory_space<vmem>>, vector<128x256xf32>
      %cst = arith.constant dense<0.000000e+00> : vector<16x256xf32>
      %12 = tpu.matmul %10, %11, %cst {dimension_numbers = #tpu.dot_dimension_numbers<[1], [0], [0], [1], [0, 0, 1, 1], [], []>} : vector<16x128xf32>, vector<128x256xf32>, vector<16x256xf32> -> vector<16x256xf32>
      %13 = vector.extract_strided_slice %12 {offsets = [0, 0], sizes = [16, 128], strides = [1, 1]} : vector<16x256xf32> to vector<16x128xf32>
      %14 = vector.shape_cast %13 : vector<16x128xf32> to vector<2x8x128xf32>
      %15 = vector.extract_strided_slice %12 {offsets = [0, 128], sizes = [16, 128], strides = [1, 1]} : vector<16x256xf32> to vector<16x128xf32>
      %16 = vector.broadcast %7 : vector<1x128xf32> to vector<16x128xf32>
      %17 = arith.addf %15, %16 : vector<16x128xf32>
      %18 = vector.shape_cast %6 : vector<1x128xf32> to vector<1x1x128xf32>
      %19 = vector.broadcast %18 : vector<1x1x128xf32> to vector<2x8x128xf32>
      %20 = arith.mulf %5, %19 : vector<2x8x128xf32>
      %cst_13 = arith.constant dense<0.000000e+00> : vector<2x8xf32>
      %21 = vector.multi_reduction <add>, %20, %cst_13 [2] : vector<2x8x128xf32> to vector<2x8xf32>
      %22 = vector.shape_cast %21 : vector<2x8xf32> to vector<2x8x1xf32>
      %cst_14 = arith.constant dense<0.000000e+00> : vector<2x8x8xf32>
      %23 = tpu.matmul %14, %4, %cst_14 {dimension_numbers = #tpu.dot_dimension_numbers<[2], [2], [1], [1], [0, 0, 0, 1, 1, 1], [0], [0]>} : vector<2x8x128xf32>, vector<2x8x128xf32>, vector<2x8x8xf32> -> vector<2x8x8xf32>
      %24 = vector.broadcast %22 : vector<2x8x1xf32> to vector<2x8x8xf32>
      %25 = arith.addf %23, %24 : vector<2x8x8xf32>
      %26 = tpu.iota {dimensions = array<i32: 2>} : vector<1x1x8xi32>
      %c0_15 = arith.constant 0 : index
      %c0_16 = arith.constant 0 : index
      %c0_17 = arith.constant 0 : index
      %27 = vector.load %arg3[%c0_15, %c0_16, %c0_17] : memref<2x1x1xi32, #tpu.memory_space<vmem>>, vector<2x1x1xi32>
      %28 = vector.broadcast %26 : vector<1x1x8xi32> to vector<2x1x8xi32>
      %29 = vector.broadcast %27 : vector<2x1x1xi32> to vector<2x1x8xi32>
      %30 = arith.cmpi slt, %28, %29 : vector<2x1x8xi32>
      %cst_18 = arith.constant -1.000000e+10 : f32
      %31 = vector.shape_cast %30 : vector<2x1x8xi1> to vector<2x1x8xi1>
      %32 = vector.broadcast %31 : vector<2x1x8xi1> to vector<2x8x8xi1>
      %33 = vector.broadcast %cst_18 : f32 to vector<2x8x8xf32>
      %34 = arith.select %32, %25, %33 : vector<2x8x8xi1>, vector<2x8x8xf32>
      %cst_19 = arith.constant dense<0xFF800000> : vector<2x8xf32>
      %35 = vector.multi_reduction <maximumf>, %34, %cst_19 [2] : vector<2x8x8xf32> to vector<2x8xf32>
      %36 = vector.shape_cast %35 : vector<2x8xf32> to vector<2x8x1xf32>
      %37 = vector.broadcast %36 : vector<2x8x1xf32> to vector<2x8x8xf32>
      %38 = arith.subf %34, %37 : vector<2x8x8xf32>
      %39 = math.exp %38 : vector<2x8x8xf32>
      %cst_20 = arith.constant dense<0.000000e+00> : vector<2x8xf32>
      %40 = vector.multi_reduction <add>, %39, %cst_20 [2] : vector<2x8x8xf32> to vector<2x8xf32>
      %41 = vector.shape_cast %40 : vector<2x8xf32> to vector<2x8x1xf32>
      %42 = tpu.reciprocal %41 {approx = true} : vector<2x8x1xf32> -> vector<2x8x1xf32>
      %43 = vector.broadcast %42 : vector<2x8x1xf32> to vector<2x8x8xf32>
      %44 = arith.mulf %39, %43 : vector<2x8x8xf32>
      %cst_21 = arith.constant dense<0.000000e+00> : vector<2x8x128xf32>
      %45 = tpu.matmul %44, %4, %cst_21 {dimension_numbers = #tpu.dot_dimension_numbers<[2], [1], [1], [2], [0, 0, 0, 1, 1, 2], [0], [0]>} : vector<2x8x8xf32>, vector<2x8x128xf32>, vector<2x8x128xf32> -> vector<2x8x128xf32>
      %46 = vector.shape_cast %45 : vector<2x8x128xf32> to vector<16x128xf32>
      %c0_22 = arith.constant 0 : index
      %c256_23 = arith.constant 256 : index
      %47 = vector.load %arg5[%c0_22, %c256_23] : memref<128x384xf32, #tpu.memory_space<vmem>>, vector<128x128xf32>
      %cst_24 = arith.constant dense<0.000000e+00> : vector<16x128xf32>
      %48 = tpu.matmul %46, %47, %cst_24 {dimension_numbers = #tpu.dot_dimension_numbers<[1], [0], [0], [1], [0, 0, 1, 1], [], []>} : vector<16x128xf32>, vector<128x128xf32>, vector<16x128xf32> -> vector<16x128xf32>
      %49 = vector.broadcast %8 : vector<1x128xf32> to vector<16x128xf32>
      %50 = arith.addf %48, %49 : vector<16x128xf32>
      %51 = math.tanh %50 : vector<16x128xf32>
      %c0_25 = arith.constant 0 : index
      %c0_26 = arith.constant 0 : index
      %52 = vector.load %arg6[%c0_25, %c0_26] : memref<256x128xf32, #tpu.memory_space<vmem>>, vector<128x128xf32>
      %cst_27 = arith.constant dense<0.000000e+00> : vector<16x128xf32>
      %53 = tpu.matmul %51, %52, %cst_27 {dimension_numbers = #tpu.dot_dimension_numbers<[1], [0], [0], [1], [0, 0, 1, 1], [], []>} : vector<16x128xf32>, vector<128x128xf32>, vector<16x128xf32> -> vector<16x128xf32>
      %54 = math.tanh %17 : vector<16x128xf32>
      %c128_28 = arith.constant 128 : index
      %c0_29 = arith.constant 0 : index
      %55 = vector.load %arg6[%c128_28, %c0_29] : memref<256x128xf32, #tpu.memory_space<vmem>>, vector<128x128xf32>
      %cst_30 = arith.constant dense<0.000000e+00> : vector<16x128xf32>
      %56 = tpu.matmul %54, %55, %cst_30 {dimension_numbers = #tpu.dot_dimension_numbers<[1], [0], [0], [1], [0, 0, 1, 1], [], []>} : vector<16x128xf32>, vector<128x128xf32>, vector<16x128xf32> -> vector<16x128xf32>
      %57 = arith.addf %53, %56 : vector<16x128xf32>
      %58 = vector.broadcast %9 : vector<1x128xf32> to vector<16x128xf32>
      %59 = arith.addf %57, %58 : vector<16x128xf32>
      %60 = vector.shape_cast %59 : vector<16x128xf32> to vector<2x8x128xf32>
      %61 = tpu.iota {dimensions = array<i32: 1>} : vector<1x8x1xi32>
      %c0_31 = arith.constant 0 : index
      %c0_32 = arith.constant 0 : index
      %c0_33 = arith.constant 0 : index
      %62 = vector.load %arg4[%c0_31, %c0_32, %c0_33] : memref<2x1x1xi32, #tpu.memory_space<vmem>>, vector<2x1x1xi32>
      %63 = vector.broadcast %61 : vector<1x8x1xi32> to vector<2x8x1xi32>
      %64 = vector.broadcast %62 : vector<2x1x1xi32> to vector<2x8x1xi32>
      %65 = arith.cmpi slt, %63, %64 : vector<2x8x1xi32>
      %cst_34 = arith.constant -1.000000e+10 : f32
      %66 = vector.shape_cast %65 : vector<2x8x1xi1> to vector<2x8x1xi1>
      %67 = vector.broadcast %66 : vector<2x8x1xi1> to vector<2x8x128xi1>
      %68 = vector.broadcast %cst_34 : f32 to vector<2x8x128xf32>
      %69 = arith.select %67, %60, %68 : vector<2x8x128xi1>, vector<2x8x128xf32>
      %c0_35 = arith.constant 0 : index
      %c0_36 = arith.constant 0 : index
      %c0_37 = arith.constant 0 : index
      %70 = vector.load %arg8[%c0_35, %c0_36, %c0_37] : memref<2x8x128xf32, #tpu.memory_space<vmem>>, vector<2x8x128xf32>
      tpu.vector_store %arg8[%c0_35, %c0_36, %c0_37], %69 {strides = array<i32>} : memref<2x8x128xf32, #tpu.memory_space<vmem>>, vector<2x8x128xf32>,
    } else {
    }
    return
  }
  func.func @transform_0(%arg0: i32) -> (i32, i32, i32) {
    %c0_i32 = arith.constant 0 : i32
    %c0_i32_0 = arith.constant 0 : i32
    %c0_i32_1 = arith.constant 0 : i32
    return %arg0, %c0_i32, %c0_i32_0 : i32, i32, i32
  }
  func.func @transform_1(%arg0: i32) -> (i32, i32, i32) {
    %c0_i32 = arith.constant 0 : i32
    %c0_i32_0 = arith.constant 0 : i32
    %c0_i32_1 = arith.constant 0 : i32
    return %arg0, %c0_i32, %c0_i32_0 : i32, i32, i32
  }
  func.func @transform_2(%arg0: i32) -> (i32, i32, i32) {
    %c0_i32 = arith.constant 0 : i32
    %c0_i32_0 = arith.constant 0 : i32
    %c0_i32_1 = arith.constant 0 : i32
    return %arg0, %c0_i32, %c0_i32_0 : i32, i32, i32
  }
  func.func @transform_3(%arg0: i32) -> (i32, i32, i32) {
    %c0_i32 = arith.constant 0 : i32
    %c0_i32_0 = arith.constant 0 : i32
    %c0_i32_1 = arith.constant 0 : i32
    return %arg0, %c0_i32, %c0_i32_0 : i32, i32, i32
  }
  func.func @transform_4(%arg0: i32) -> (i32, i32) {
    %c0_i32 = arith.constant 0 : i32
    %c0_i32_0 = arith.constant 0 : i32
    %c0_i32_1 = arith.constant 0 : i32
    return %c0_i32, %c0_i32_0 : i32, i32
  }
  func.func @transform_5(%arg0: i32) -> (i32, i32) {
    %c0_i32 = arith.constant 0 : i32
    %c0_i32_0 = arith.constant 0 : i32
    %c0_i32_1 = arith.constant 0 : i32
    return %c0_i32, %c0_i32_0 : i32, i32
  }
  func.func @transform_6(%arg0: i32) -> (i32, i32) {
    %c0_i32 = arith.constant 0 : i32
    %c0_i32_0 = arith.constant 0 : i32
    %c0_i32_1 = arith.constant 0 : i32
    return %c0_i32, %c0_i32_0 : i32, i32
  }
  func.func @transform_7(%arg0: i32) -> (i32, i32, i32) {
    %c0_i32 = arith.constant 0 : i32
    %c0_i32_0 = arith.constant 0 : i32
    %c0_i32_1 = arith.constant 0 : i32
    return %arg0, %c0_i32, %c0_i32_0 : i32, i32, i32
  }
}

</mosaic_0001>

<llo_original>
// kernel: tpu_custom_call.1
$region0: #{tpu_custom_call.1}
  #allocation0 [shape = 'u32[]', space=smem, size = 0x4, offset = 0x4, fixed_abs, tag = 'smem constant byte address 0x4 - core index']
  #allocation1 [shape = 'u32[144,128]{1,0:T(1,128)}', space=vmem, size = 0x12000, scoped, tag = 'internal scratch']
  %s0 = inlined_call_operand.hbm [shape: f32[2,8,128], index: 0, kind: input, shape index: {}]
  %s1 = inlined_call_operand.hbm [shape: f32[2,8,128], index: 1, kind: input, shape index: {}]
  %s2 = inlined_call_operand.vmem [shape: s32[2,1,1], index: 2, kind: input, shape index: {}]
  %s3 = inlined_call_operand.vmem [shape: s32[2,1,1], index: 3, kind: input, shape index: {}]
  %s4 = inlined_call_operand.hbm [shape: f32[128,384], index: 4, kind: input, shape index: {}]
  %s5 = inlined_call_operand.hbm [shape: f32[256,128], index: 5, kind: input, shape index: {}]
  %s6 = inlined_call_operand.vmem [shape: f32[1,512], index: 6, kind: input, shape index: {}]
  %s7 = inlined_call_operand.hbm [shape: f32[2,8,128], index: 7, kind: output, shape index: {}]
  %s8 = sld [smem:[#allocation0]]
  $region58: #{tpu_custom_call.1} parent=0
    _
  %s10 = ssub.s32 1, %s8
  %s11 = scalar_select 0, %s10, %s8
  $region1: #{tpu_custom_call.1} parent=0
    #allocation2 [shape = 'u8[8192]{0}', space=vmem, size = 0x2000, scoped, tag = 'input window, operand 0, single buffered']
    #allocation3 [shape = 's32[1]{0}', space=sflag, size = 0x4, scoped, tag = 'scoped memory for tpu_custom_call.1']
    #allocation4 [shape = 's32[1]{0}', space=sflag, size = 0x4, scoped, tag = 'scoped memory for tpu_custom_call.1']
    #allocation5 [shape = 'u8[8192]{0}', space=vmem, size = 0x2000, scoped, tag = 'input window, operand 1, single buffered']
    #allocation6 [shape = 's32[1]{0}', space=sflag, size = 0x4, scoped, tag = 'scoped memory for tpu_custom_call.1']
    #allocation7 [shape = 'u8[196608]{0}', space=vmem, size = 0x30000, scoped, tag = 'input window, operand 4, single buffered']
    #allocation8 [shape = 'u8[131072]{0}', space=vmem, size = 0x20000, scoped, tag = 'input window, operand 5, single buffered']
    #allocation9 [shape = 's32[1]{0}', space=sflag, size = 0x4, scoped, tag = 'scoped memory for tpu_custom_call.1']
    #allocation10 [shape = 'u8[8192]{0}', space=vmem, size = 0x2000, scoped, tag = 'output window, operand 0, single buffered']
    %12 = vsyncpa [#allocation3], 0
    %13 = vsyncpa [#allocation6], 0
    %14 = vsyncpa [#allocation9], 0
    %15 = vsyncpa [#allocation4], 0
    // Predicated region
    $region2: #{tpu_custom_call.1} parent=1 // pred_check
      _
    $region3: #{tpu_custom_call.1} parent=1 // pred_check_branch
      %17 = sbr.rel (0) target = $region5
    $region4: #{tpu_custom_call.1} parent=1 // pred_region
      %s19 = ssub.s32 256, 256
      %20 = vsyncadd [#allocation3], %s19
      %s21 = sshll.u32 [#allocation2], 4
      %s22 = int_to_ptr.vmem [resolvable:$true] %s21
      %27 = dma.hbm_to_vmem [thread:$0]  %s0, 256, %s22, [#allocation3], 128, 128, 8
    $region5: #{tpu_custom_call.1} parent=1 // pred_fallthru
      _
    // Predicated region
    $region6: #{tpu_custom_call.1} parent=1 // pred_check
      _
    $region7: #{tpu_custom_call.1} parent=1 // pred_check_branch
      %29 = sbr.rel (0) target = $region9
    $region8: #{tpu_custom_call.1} parent=1 // pred_region
      %s31 = ssub.s32 256, 256
      %32 = vsyncadd [#allocation6], %s31
      %s33 = sshll.u32 [#allocation5], 4
      %s34 = int_to_ptr.vmem [resolvable:$true] %s33
      %39 = dma.hbm_to_vmem [thread:$0]  %s1, 256, %s34, [#allocation6], 128, 128, 8
    $region9: #{tpu_custom_call.1} parent=1 // pred_fallthru
      _
    // Predicated region
    $region10: #{tpu_custom_call.1} parent=1 // pred_check
      _
    $region11: #{tpu_custom_call.1} parent=1 // pred_check_branch
      %41 = sbr.rel (0) target = $region13
    $region12: #{tpu_custom_call.1} parent=1 // pred_region
      _
    $region13: #{tpu_custom_call.1} parent=1 // pred_fallthru
      _
    // Predicated region
    $region14: #{tpu_custom_call.1} parent=1 // pred_check
      _
    $region15: #{tpu_custom_call.1} parent=1 // pred_check_branch
      %43 = sbr.rel (0) target = $region17
    $region16: #{tpu_custom_call.1} parent=1 // pred_region
      _
    $region17: #{tpu_custom_call.1} parent=1 // pred_fallthru
      _
    // Predicated region
    $region18: #{tpu_custom_call.1} parent=1 // pred_check
      _
    $region19: #{tpu_custom_call.1} parent=1 // pred_check_branch
      %45 = sbr.rel (0) target = $region21
    $region20: #{tpu_custom_call.1} parent=1 // pred_region
      %s47 = ssub.s32 6144, 6144
      %48 = vsyncadd [#allocation6], %s47
      %s49 = sshll.u32 [#allocation7], 4
      %s50 = int_to_ptr.vmem [resolvable:$true] %s49
      %55 = dma.hbm_to_vmem [thread:$0]  %s4, 6144, %s50, [#allocation6], 384, 384, 24
    $region21: #{tpu_custom_call.1} parent=1 // pred_fallthru
      _
    // Predicated region
    $region22: #{tpu_custom_call.1} parent=1 // pred_check
      _
    $region23: #{tpu_custom_call.1} parent=1 // pred_check_branch
      %57 = sbr.rel (0) target = $region25
    $region24: #{tpu_custom_call.1} parent=1 // pred_region
      %s59 = ssub.s32 4096, 4096
      %60 = vsyncadd [#allocation9], %s59
      %s61 = sshll.u32 [#allocation8], 4
      %s62 = int_to_ptr.vmem [resolvable:$true] %s61
      %67 = dma.hbm_to_vmem [thread:$0]  %s5, 4096, %s62, [#allocation9], 128, 128, 8
    $region25: #{tpu_custom_call.1} parent=1 // pred_fallthru
      _
    // Predicated region
    $region26: #{tpu_custom_call.1} parent=1 // pred_check
      _
    $region27: #{tpu_custom_call.1} parent=1 // pred_check_branch
      %69 = sbr.rel (0) target = $region29
    $region28: #{tpu_custom_call.1} parent=1 // pred_region
      _
    $region29: #{tpu_custom_call.1} parent=1 // pred_fallthru
      _
    // Predicated region
    $region30: #{tpu_custom_call.1} parent=1 // pred_check
      _
    $region31: #{tpu_custom_call.1} parent=1 // pred_check_branch
      %71 = sbr.rel (0) target = $region33
    $region32: #{tpu_custom_call.1} parent=1 // pred_region
      %72 = dma.done [#allocation3], 256
    $region33: #{tpu_custom_call.1} parent=1 // pred_fallthru
      _
    // Predicated region
    $region34: #{tpu_custom_call.1} parent=1 // pred_check
      _
    $region35: #{tpu_custom_call.1} parent=1 // pred_check_branch
      %74 = sbr.rel (0) target = $region37
    $region36: #{tpu_custom_call.1} parent=1 // pred_region
      %75 = dma.done [#allocation6], 256
    $region37: #{tpu_custom_call.1} parent=1 // pred_fallthru
      _
    // Predicated region
    $region38: #{tpu_custom_call.1} parent=1 // pred_check
      _
    $region39: #{tpu_custom_call.1} parent=1 // pred_check_branch
      %77 = sbr.rel (0) target = $region41
    $region40: #{tpu_custom_call.1} parent=1 // pred_region
      %78 = dma.done [#allocation6], 6144
    $region41: #{tpu_custom_call.1} parent=1 // pred_fallthru
      _
    // Predicated region
    $region42: #{tpu_custom_call.1} parent=1 // pred_check
      _
    $region43: #{tpu_custom_call.1} parent=1 // pred_check_branch
      %80 = sbr.rel (0) target = $region45
    $region44: #{tpu_custom_call.1} parent=1 // pred_region
      %81 = dma.done [#allocation9], 4096
    $region45: #{tpu_custom_call.1} parent=1 // pred_fallthru
      _
    %s82 = smul.u32 0, 2
    %p83 = scmp.lt.s32.totalorder %s82, 2
    // Predicated region
    $region46: #{tpu_custom_call.1} parent=1 // pred_check
      %p84 = pneg %p83
    $region47: #{tpu_custom_call.1} parent=1 // pred_check_branch
      %86 = sbr.rel (%p84) target = $region49
    $region48: #{tpu_custom_call.1} parent=1 // pred_region
      %v87 = vld [vmem:[#allocation2] sm:$0xff]
      %v88 = vld [vmem:[#allocation2 + $0x8] sm:$0xff]
      %v89 = vld [vmem:[#allocation5] sm:$0xff]
      %v90 = vld [vmem:[#allocation5 + $0x8] sm:$0xff]
      %v91 = vld [vmem:[%s6] sm:$0x1]
      %v92 = vld [vmem:[%s6 + $0x1] sm:$0x1]
      %v93 = vld [vmem:[%s6 + $0x2] sm:$0x1]
      %v94 = vld [vmem:[%s6 + $0x3] sm:$0x1]
      %v95 = vld [vmem:[#allocation7] sm:$0xff]
      %v96 = vld [vmem:[#allocation7 + $0x8] sm:$0xff]
      %v97 = vld [vmem:[#allocation7 + $0x18] sm:$0xff]
      %v98 = vld [vmem:[#allocation7 + $0x20] sm:$0xff]
      %v99 = vld [vmem:[#allocation7 + $0x30] sm:$0xff]
      %v100 = vld [vmem:[#allocation7 + $0x38] sm:$0xff]
      %v101 = vld [vmem:[#allocation7 + $0x48] sm:$0xff]
      %v102 = vld [vmem:[#allocation7 + $0x50] sm:$0xff]
      %v103 = vld [vmem:[#allocation7 + $0x60] sm:$0xff]
      %v104 = vld [vmem:[#allocation7 + $0x68] sm:$0xff]
      %v105 = vld [vmem:[#allocation7 + $0x78] sm:$0xff]
      %v106 = vld [vmem:[#allocation7 + $0x80] sm:$0xff]
      %v107 = vld [vmem:[#allocation7 + $0x90] sm:$0xff]
      %v108 = vld [vmem:[#allocation7 + $0x98] sm:$0xff]
      %v109 = vld [vmem:[#allocation7 + $0xa8] sm:$0xff]
      %v110 = vld [vmem:[#allocation7 + $0xb0] sm:$0xff]
      %v111 = vld [vmem:[#allocation7 + $0xc0] sm:$0xff]
      %v112 = vld [vmem:[#allocation7 + $0xc8] sm:$0xff]
      %v113 = vld [vmem:[#allocation7 + $0xd8] sm:$0xff]
      %v114 = vld [vmem:[#allocation7 + $0xe0] sm:$0xff]
      %v115 = vld [vmem:[#allocation7 + $0xf0] sm:$0xff]
      %v116 = vld [vmem:[#allocation7 + $0xf8] sm:$0xff]
      %v117 = vld [vmem:[#allocation7 + $0x108] sm:$0xff]
      %v118 = vld [vmem:[#allocation7 + $0x110] sm:$0xff]
      %v119 = vld [vmem:[#allocation7 + $0x120] sm:$0xff]
      %v120 = vld [vmem:[#allocation7 + $0x128] sm:$0xff]
      %v121 = vld [vmem:[#allocation7 + $0x138] sm:$0xff]
      %v122 = vld [vmem:[#allocation7 + $0x140] sm:$0xff]
      %v123 = vld [vmem:[#allocation7 + $0x150] sm:$0xff]
      %v124 = vld [vmem:[#allocation7 + $0x158] sm:$0xff]
      %v125 = vld [vmem:[#allocation7 + $0x168] sm:$0xff]
      %v126 = vld [vmem:[#allocation7 + $0x170] sm:$0xff]
      %127 = vmatprep.subr.mxu0 %v96
      %128 = vmatpush1.msra.mxu0 %v95
      %129 = vmatprep.subr.mxu0 %v98
      %130 = vmatpush1.msra.mxu0 %v97
      %131 = vmatprep.subr.mxu0 %v100
      %132 = vmatpush1.msra.mxu0 %v99
      %133 = vmatprep.subr.mxu0 %v102
      %134 = vmatpush1.msra.mxu0 %v101
      %135 = vmatprep.subr.mxu0 %v104
      %136 = vmatpush1.msra.mxu0 %v103
      %137 = vmatprep.subr.mxu0 %v106
      %138 = vmatpush1.msra.mxu0 %v105
      %139 = vmatprep.subr.mxu0 %v108
      %140 = vmatpush1.msra.mxu0 %v107
      %141 = vmatprep.subr.mxu0 %v110
      %142 = vmatpush1.msra.mxu0 %v109
      %143 = vmatprep.subr.mxu0 %v112
      %144 = vmatpush1.msra.mxu0 %v111
      %145 = vmatprep.subr.mxu0 %v114
      %146 = vmatpush1.msra.mxu0 %v113
      %147 = vmatprep.subr.mxu0 %v116
      %148 = vmatpush1.msra.mxu0 %v115
      %149 = vmatprep.subr.mxu0 %v118
      %150 = vmatpush1.msra.mxu0 %v117
      %151 = vmatprep.subr.mxu0 %v120
      %152 = vmatpush1.msra.mxu0 %v119
      %153 = vmatprep.subr.mxu0 %v122
      %154 = vmatpush1.msra.mxu0 %v121
      %155 = vmatprep.subr.mxu0 %v124
      %156 = vmatpush1.msra.mxu0 %v123
      %157 = vmatprep.subr.mxu0 %v126
      %158 = vmatpush1.msra.mxu0 %v125
      %159 = vmatprep.subr.mxu0 0.0
      %160 = vmatpush1.msra.mxu0 0.0
      %161 = vmatprep.subr.mxu0 0.0
      %162 = vmatpush1.msra.mxu0 0.0
      %163 = vmatprep.subr.mxu0 0.0
      %164 = vmatpush1.msra.mxu0 0.0
      %165 = vmatprep.subr.mxu0 0.0
      %166 = vmatpush1.msra.mxu0 0.0
      %167 = vmatprep.subr.mxu0 0.0
      %168 = vmatpush1.msra.mxu0 0.0
      %169 = vmatprep.subr.mxu0 0.0
      %170 = vmatpush1.msra.mxu0 0.0
      %171 = vmatprep.subr.mxu0 0.0
      %172 = vmatpush1.msra.mxu0 0.0
      %173 = vmatprep.subr.mxu0 0.0
      %174 = vmatpush1.msra.mxu0 0.0
      %175 = vmatprep.subr.mxu0 0.0
      %176 = vmatpush1.msra.mxu0 0.0
      %177 = vmatprep.subr.mxu0 0.0
      %178 = vmatpush1.msra.mxu0 0.0
      %179 = vmatprep.subr.mxu0 0.0
      %180 = vmatpush1.msra.mxu0 0.0
      %181 = vmatprep.subr.mxu0 0.0
      %182 = vmatpush1.msra.mxu0 0.0
      %183 = vmatprep.subr.mxu0 0.0
      %184 = vmatpush1.msra.mxu0 0.0
      %185 = vmatprep.subr.mxu0 0.0
      %186 = vmatpush1.msra.mxu0 0.0
      %187 = vmatprep.subr.mxu0 0.0
      %188 = vmatpush1.msra.mxu0 0.0
      %189 = vmatprep.subr.mxu0 0.0
      %190 = vmatpush1.msra.mxu0 0.0
      %191 = vmatprep.mubr.f32.mxu0 0.0
      %192 = vmatmul.mubr.f32.gmra.mrb[0].mxu0 %v89
      %v193 = vpop.f32.mrb[0].mxu0
      %v194 = vadd.f32 0.0, %v193
      %v195 = vpop.f32.mrb[0].mxu0
      %v196 = vadd.f32 0.0, %v195
      %197 = vmatprep.mubr.f32.mxu0 0.0
      %198 = vmatmul.mubr.f32.gmra.mrb[0].mxu0 %v90
      %v199 = vpop.f32.mrb[0].mxu0
      %v200 = vadd.f32 0.0, %v199
      %v201 = vpop.f32.mrb[0].mxu0
      %v202 = vadd.f32 0.0, %v201
      %203 = vdwg.mxu0
      %v205 = vlaneseq
      %v206 = vshrl.u32 %v205, 7
      %v207 = vsub.s32 0, %v206
      %v208 = vrot.slane %v92, %v207
      %v210 = vadd.f32 %v196, %v208
      %v211 = vadd.f32 %v202, %v208
      %v213 = vlaneseq
      %v214 = vshrl.u32 %v213, 7
      %v215 = vsub.s32 0, %v214
      %v216 = vrot.slane %v91, %v215
      %v218 = vmul.f32 %v89, %v216
      %v219 = vmul.f32 %v90, %v216
      %220 = vadd.xlane.f32.xlu0 %v218
      %v221 = vpop.xlane.xlu0 %220
      %222 = vadd.xlane.f32.xlu0 %v219
      %v223 = vpop.xlane.xlu0 %222
      %224 = vmatprep.subr.mxu0 0.0
      %225 = vmatpush1.xpose.msra.mxu0 %v87
      %226 = vmatprep.subr.mxu0 0.0
      %227 = vmatpush1.xpose.msra.mxu0 0.0
      %228 = vmatprep.subr.mxu0 0.0
      %229 = vmatpush1.xpose.msra.mxu0 0.0
      %230 = vmatprep.subr.mxu0 0.0
      %231 = vmatpush1.xpose.msra.mxu0 0.0
      %232 = vmatprep.subr.mxu0 0.0
      %233 = vmatpush1.xpose.msra.mxu0 0.0
      %234 = vmatprep.subr.mxu0 0.0
      %235 = vmatpush1.xpose.msra.mxu0 0.0
      %236 = vmatprep.subr.mxu0 0.0
      %237 = vmatpush1.xpose.msra.mxu0 0.0
      %238 = vmatprep.subr.mxu0 0.0
      %239 = vmatpush1.xpose.msra.mxu0 0.0
      %240 = vmatprep.subr.mxu0 0.0
      %241 = vmatpush1.xpose.msra.mxu0 0.0
      %242 = vmatprep.subr.mxu0 0.0
      %243 = vmatpush1.xpose.msra.mxu0 0.0
      %244 = vmatprep.subr.mxu0 0.0
      %245 = vmatpush1.xpose.msra.mxu0 0.0
      %246 = vmatprep.subr.mxu0 0.0
      %247 = vmatpush1.xpose.msra.mxu0 0.0
      %248 = vmatprep.subr.mxu0 0.0
      %249 = vmatpush1.xpose.msra.mxu0 0.0
      %250 = vmatprep.subr.mxu0 0.0
      %251 = vmatpush1.xpose.msra.mxu0 0.0
      %252 = vmatprep.subr.mxu0 0.0
      %253 = vmatpush1.xpose.msra.mxu0 0.0
      %254 = vmatprep.subr.mxu0 0.0
      %255 = vmatpush1.xpose.msra.mxu0 0.0
      %256 = vmatprep.subr.mxu0 0.0
      %257 = vmatpush1.xpose.msra.mxu0 0.0
      %258 = vmatprep.subr.mxu0 0.0
      %259 = vmatpush1.xpose.msra.mxu0 0.0
      %260 = vmatprep.subr.mxu0 0.0
      %261 = vmatpush1.xpose.msra.mxu0 0.0
      %262 = vmatprep.subr.mxu0 0.0
      %263 = vmatpush1.xpose.msra.mxu0 0.0
      %264 = vmatprep.subr.mxu0 0.0
      %265 = vmatpush1.xpose.msra.mxu0 0.0
      %266 = vmatprep.subr.mxu0 0.0
      %267 = vmatpush1.xpose.msra.mxu0 0.0
      %268 = vmatprep.subr.mxu0 0.0
      %269 = vmatpush1.xpose.msra.mxu0 0.0
      %270 = vmatprep.subr.mxu0 0.0
      %271 = vmatpush1.xpose.msra.mxu0 0.0
      %272 = vmatprep.subr.mxu0 0.0
      %273 = vmatpush1.xpose.msra.mxu0 0.0
      %274 = vmatprep.subr.mxu0 0.0
      %275 = vmatpush1.xpose.msra.mxu0 0.0
      %276 = vmatprep.subr.mxu0 0.0
      %277 = vmatpush1.xpose.msra.mxu0 0.0
      %278 = vmatprep.subr.mxu0 0.0
      %279 = vmatpush1.xpose.msra.mxu0 0.0
      %280 = vmatprep.subr.mxu0 0.0
      %281 = vmatpush1.xpose.msra.mxu0 0.0
      %282 = vmatprep.subr.mxu0 0.0
      %283 = vmatpush1.xpose.msra.mxu0 0.0
      %284 = vmatprep.subr.mxu0 0.0
      %285 = vmatpush1.xpose.msra.mxu0 0.0
      %286 = vmatprep.subr.mxu0 0.0
      %287 = vmatpush1.xpose.msra.mxu0 0.0
      %288 = vmatprep.mubr.f32.mxu0 0.0
      %289 = vmatmul.mubr.f32.gmra.mrb[0].mxu0 %v194
      %v290 = vpop.f32.mrb[0].mxu0
      %v291 = vadd.f32 %v221, %v290
      %v292 = vpop.f32.mrb[0].mxu0
      %293 = vdwg.mxu0
      %294 = vmatprep.subr.mxu0 0.0
      %295 = vmatpush1.xpose.msra.mxu0 %v88
      %296 = vmatprep.subr.mxu0 0.0
      %297 = vmatpush1.xpose.msra.mxu0 0.0
      %298 = vmatprep.subr.mxu0 0.0
      %299 = vmatpush1.xpose.msra.mxu0 0.0
      %300 = vmatprep.subr.mxu0 0.0
      %301 = vmatpush1.xpose.msra.mxu0 0.0
      %302 = vmatprep.subr.mxu0 0.0
      %303 = vmatpush1.xpose.msra.mxu0 0.0
      %304 = vmatprep.subr.mxu0 0.0
      %305 = vmatpush1.xpose.msra.mxu0 0.0
      %306 = vmatprep.subr.mxu0 0.0
      %307 = vmatpush1.xpose.msra.mxu0 0.0
      %308 = vmatprep.subr.mxu0 0.0
      %309 = vmatpush1.xpose.msra.mxu0 0.0
      %310 = vmatprep.subr.mxu0 0.0
      %311 = vmatpush1.xpose.msra.mxu0 0.0
      %312 = vmatprep.subr.mxu0 0.0
      %313 = vmatpush1.xpose.msra.mxu0 0.0
      %314 = vmatprep.subr.mxu0 0.0
      %315 = vmatpush1.xpose.msra.mxu0 0.0
      %316 = vmatprep.subr.mxu0 0.0
      %317 = vmatpush1.xpose.msra.mxu0 0.0
      %318 = vmatprep.subr.mxu0 0.0
      %319 = vmatpush1.xpose.msra.mxu0 0.0
      %320 = vmatprep.subr.mxu0 0.0
      %321 = vmatpush1.xpose.msra.mxu0 0.0
      %322 = vmatprep.subr.mxu0 0.0
      %323 = vmatpush1.xpose.msra.mxu0 0.0
      %324 = vmatprep.subr.mxu0 0.0
      %325 = vmatpush1.xpose.msra.mxu0 0.0
      %326 = vmatprep.subr.mxu0 0.0
      %327 = vmatpush1.xpose.msra.mxu0 0.0
      %328 = vmatprep.subr.mxu0 0.0
      %329 = vmatpush1.xpose.msra.mxu0 0.0
      %330 = vmatprep.subr.mxu0 0.0
      %331 = vmatpush1.xpose.msra.mxu0 0.0
      %332 = vmatprep.subr.mxu0 0.0
      %333 = vmatpush1.xpose.msra.mxu0 0.0
      %334 = vmatprep.subr.mxu0 0.0
      %335 = vmatpush1.xpose.msra.mxu0 0.0
      %336 = vmatprep.subr.mxu0 0.0
      %337 = vmatpush1.xpose.msra.mxu0 0.0
      %338 = vmatprep.subr.mxu0 0.0
      %339 = vmatpush1.xpose.msra.mxu0 0.0
      %340 = vmatprep.subr.mxu0 0.0
      %341 = vmatpush1.xpose.msra.mxu0 0.0
      %342 = vmatprep.subr.mxu0 0.0
      %343 = vmatpush1.xpose.msra.mxu0 0.0
      %344 = vmatprep.subr.mxu0 0.0
      %345 = vmatpush1.xpose.msra.mxu0 0.0
      %346 = vmatprep.subr.mxu0 0.0
      %347 = vmatpush1.xpose.msra.mxu0 0.0
      %348 = vmatprep.subr.mxu0 0.0
      %349 = vmatpush1.xpose.msra.mxu0 0.0
      %350 = vmatprep.subr.mxu0 0.0
      %351 = vmatpush1.xpose.msra.mxu0 0.0
      %352 = vmatprep.subr.mxu0 0.0
      %353 = vmatpush1.xpose.msra.mxu0 0.0
      %354 = vmatprep.subr.mxu0 0.0
      %355 = vmatpush1.xpose.msra.mxu0 0.0
      %356 = vmatprep.subr.mxu0 0.0
      %357 = vmatpush1.xpose.msra.mxu0 0.0
      %358 = vmatprep.mubr.f32.mxu0 0.0
      %359 = vmatmul.mubr.f32.gmra.mrb[0].mxu0 %v200
      %v360 = vpop.f32.mrb[0].mxu0
      %v361 = vadd.f32 %v223, %v360
      %v362 = vpop.f32.mrb[0].mxu0
      %363 = vdwg.mxu0
      %v364 = vlaneseq
      %v365 = vand.u32 %v364, 127
      %v366 = vld [vmem:[%s2] sm:$0x1]
      %v367 = vld [vmem:[%s2 + $0x1] sm:$0x1]
      %368 = vset.pattern.permute.xlu0 0
      %369 = vperm.xlu0 %368, %v366
      %v370 = vpop.permute.xlu0 %369
      %v371 = vlaneseq
      %v372 = vshrl.u32 %v371, 7
      %v373 = vsub.s32 0, %v372
      %v374 = vrot.slane %v370, %v373
      %375 = vset.pattern.permute.xlu0 0
      %376 = vperm.xlu0 %375, %v367
      %v377 = vpop.permute.xlu0 %376
      %v378 = vlaneseq
      %v379 = vshrl.u32 %v378, 7
      %v380 = vsub.s32 0, %v379
      %v381 = vrot.slane %v377, %v380
      %vm382 = vcmp.lt.s32.totalorder %v365, %v374
      %vm383 = vcmp.lt.s32.totalorder %v365, %v381
      %v384 = vsel %vm382, 1, 0
      %v385 = vsel %vm383, 1, 0
      %vm386 = vcmp.eq.s32.totalorder %v384, 1
      %vm387 = vcmp.eq.s32.totalorder %v385, 1
      %v388 = vsel %vm386, %v291, -1e+10
      %v389 = vsel %vm387, %v361, -1e+10
      %vm390 = vcmask 64512
      %v391 = vsel %vm390, %v388, -inf
      %392 = vmax.xlane.f32.xlu0 %v391
      %v393 = vpop.xlane.xlu0 %392
      %v394 = vsel %vm390, %v389, -inf
      %395 = vmax.xlane.f32.xlu0 %v394
      %v396 = vpop.xlane.xlu0 %395
      %v397 = vsub.f32 %v388, %v393
      %v398 = vsub.f32 %v389, %v396
      %v399 = vmul.f32 %v397, 1.442695
      %v400 = vpow.pop %v399
      %v401 = vmul.f32 %v398, 1.442695
      %v402 = vpow.pop %v401
      %v403 = vsel %vm390, %v400, 0.0
      %404 = vadd.xlane.f32.xlu0 %v403
      %v405 = vpop.xlane.xlu0 %404
      %v406 = vsel %vm390, %v402, 0.0
      %407 = vadd.xlane.f32.xlu0 %v406
      %v408 = vpop.xlane.xlu0 %407
      %v409 = vrcp.pop %v405
      %v410 = vrcp.pop %v408
      %v411 = vmul.f32 %v400, %v409
      %v412 = vmul.f32 %v402, %v410
      %v414 = vsel %vm390, %v411, 0
      %416 = vmatprep.subr.mxu0 0.0
      %417 = vmatpush1.msra.mxu0 %v87
      %418 = vmatprep.subr.mxu0 0.0
      %419 = vmatpush1.msra.mxu0 0.0
      %420 = vmatprep.subr.mxu0 0.0
      %421 = vmatpush1.msra.mxu0 0.0
      %422 = vmatprep.subr.mxu0 0.0
      %423 = vmatpush1.msra.mxu0 0.0
      %424 = vmatprep.subr.mxu0 0.0
      %425 = vmatpush1.msra.mxu0 0.0
      %426 = vmatprep.subr.mxu0 0.0
      %427 = vmatpush1.msra.mxu0 0.0
      %428 = vmatprep.subr.mxu0 0.0
      %429 = vmatpush1.msra.mxu0 0.0
      %430 = vmatprep.subr.mxu0 0.0
      %431 = vmatpush1.msra.mxu0 0.0
      %432 = vmatprep.subr.mxu0 0.0
      %433 = vmatpush1.msra.mxu0 0.0
      %434 = vmatprep.subr.mxu0 0.0
      %435 = vmatpush1.msra.mxu0 0.0
      %436 = vmatprep.subr.mxu0 0.0
      %437 = vmatpush1.msra.mxu0 0.0
      %438 = vmatprep.subr.mxu0 0.0
      %439 = vmatpush1.msra.mxu0 0.0
      %440 = vmatprep.subr.mxu0 0.0
      %441 = vmatpush1.msra.mxu0 0.0
      %442 = vmatprep.subr.mxu0 0.0
      %443 = vmatpush1.msra.mxu0 0.0
      %444 = vmatprep.subr.mxu0 0.0
      %445 = vmatpush1.msra.mxu0 0.0
      %446 = vmatprep.subr.mxu0 0.0
      %447 = vmatpush1.msra.mxu0 0.0
      %448 = vmatprep.subr.mxu0 0.0
      %449 = vmatpush1.msra.mxu0 0.0
      %450 = vmatprep.subr.mxu0 0.0
      %451 = vmatpush1.msra.mxu0 0.0
      %452 = vmatprep.subr.mxu0 0.0
      %453 = vmatpush1.msra.mxu0 0.0
      %454 = vmatprep.subr.mxu0 0.0
      %455 = vmatpush1.msra.mxu0 0.0
      %456 = vmatprep.subr.mxu0 0.0
      %457 = vmatpush1.msra.mxu0 0.0
      %458 = vmatprep.subr.mxu0 0.0
      %459 = vmatpush1.msra.mxu0 0.0
      %460 = vmatprep.subr.mxu0 0.0
      %461 = vmatpush1.msra.mxu0 0.0
      %462 = vmatprep.subr.mxu0 0.0
      %463 = vmatpush1.msra.mxu0 0.0
      %464 = vmatprep.subr.mxu0 0.0
      %465 = vmatpush1.msra.mxu0 0.0
      %466 = vmatprep.subr.mxu0 0.0
      %467 = vmatpush1.msra.mxu0 0.0
      %468 = vmatprep.subr.mxu0 0.0
      %469 = vmatpush1.msra.mxu0 0.0
      %470 = vmatprep.subr.mxu0 0.0
      %471 = vmatpush1.msra.mxu0 0.0
      %472 = vmatprep.subr.mxu0 0.0
      %473 = vmatpush1.msra.mxu0 0.0
      %474 = vmatprep.subr.mxu0 0.0
      %475 = vmatpush1.msra.mxu0 0.0
      %476 = vmatprep.subr.mxu0 0.0
      %477 = vmatpush1.msra.mxu0 0.0
      %478 = vmatprep.subr.mxu0 0.0
      %479 = vmatpush1.msra.mxu0 0.0
      %480 = vmatprep.mubr.f32.mxu0 0.0
      %481 = vmatmul.mubr.f32.gmra.mrb[0].mxu0 %v414
      %v482 = vpop.f32.mrb[0].mxu0
      %v483 = vadd.f32 0.0, %v482
      %v484 = vpop.f32.mrb[0].mxu0
      %485 = vdwg.mxu0
      %v487 = vsel %vm390, %v412, 0
      %489 = vmatprep.subr.mxu0 0.0
      %490 = vmatpush1.msra.mxu0 %v88
      %491 = vmatprep.subr.mxu0 0.0
      %492 = vmatpush1.msra.mxu0 0.0
      %493 = vmatprep.subr.mxu0 0.0
      %494 = vmatpush1.msra.mxu0 0.0
      %495 = vmatprep.subr.mxu0 0.0
      %496 = vmatpush1.msra.mxu0 0.0
      %497 = vmatprep.subr.mxu0 0.0
      %498 = vmatpush1.msra.mxu0 0.0
      %499 = vmatprep.subr.mxu0 0.0
      %500 = vmatpush1.msra.mxu0 0.0
      %501 = vmatprep.subr.mxu0 0.0
      %502 = vmatpush1.msra.mxu0 0.0
      %503 = vmatprep.subr.mxu0 0.0
      %504 = vmatpush1.msra.mxu0 0.0
      %505 = vmatprep.subr.mxu0 0.0
      %506 = vmatpush1.msra.mxu0 0.0
      %507 = vmatprep.subr.mxu0 0.0
      %508 = vmatpush1.msra.mxu0 0.0
      %509 = vmatprep.subr.mxu0 0.0
      %510 = vmatpush1.msra.mxu0 0.0
      %511 = vmatprep.subr.mxu0 0.0
      %512 = vmatpush1.msra.mxu0 0.0
      %513 = vmatprep.subr.mxu0 0.0
      %514 = vmatpush1.msra.mxu0 0.0
      %515 = vmatprep.subr.mxu0 0.0
      %516 = vmatpush1.msra.mxu0 0.0
      %517 = vmatprep.subr.mxu0 0.0
      %518 = vmatpush1.msra.mxu0 0.0
      %519 = vmatprep.subr.mxu0 0.0
      %520 = vmatpush1.msra.mxu0 0.0
      %521 = vmatprep.subr.mxu0 0.0
      %522 = vmatpush1.msra.mxu0 0.0
      %523 = vmatprep.subr.mxu0 0.0
      %524 = vmatpush1.msra.mxu0 0.0
      %525 = vmatprep.subr.mxu0 0.0
      %526 = vmatpush1.msra.mxu0 0.0
      %527 = vmatprep.subr.mxu0 0.0
      %528 = vmatpush1.msra.mxu0 0.0
      %529 = vmatprep.subr.mxu0 0.0
      %530 = vmatpush1.msra.mxu0 0.0
      %531 = vmatprep.subr.mxu0 0.0
      %532 = vmatpush1.msra.mxu0 0.0
      %533 = vmatprep.subr.mxu0 0.0
      %534 = vmatpush1.msra.mxu0 0.0
      %535 = vmatprep.subr.mxu0 0.0
      %536 = vmatpush1.msra.mxu0 0.0
      %537 = vmatprep.subr.mxu0 0.0
      %538 = vmatpush1.msra.mxu0 0.0
      %539 = vmatprep.subr.mxu0 0.0
      %540 = vmatpush1.msra.mxu0 0.0
      %541 = vmatprep.subr.mxu0 0.0
      %542 = vmatpush1.msra.mxu0 0.0
      %543 = vmatprep.subr.mxu0 0.0
      %544 = vmatpush1.msra.mxu0 0.0
      %545 = vmatprep.subr.mxu0 0.0
      %546 = vmatpush1.msra.mxu0 0.0
      %547 = vmatprep.subr.mxu0 0.0
      %548 = vmatpush1.msra.mxu0 0.0
      %549 = vmatprep.subr.mxu0 0.0
      %550 = vmatpush1.msra.mxu0 0.0
      %551 = vmatprep.subr.mxu0 0.0
      %552 = vmatpush1.msra.mxu0 0.0
      %553 = vmatprep.mubr.f32.mxu0 0.0
      %554 = vmatmul.mubr.f32.gmra.mrb[0].mxu0 %v487
      %v555 = vpop.f32.mrb[0].mxu0
      %v556 = vadd.f32 0.0, %v555
      %v557 = vpop.f32.mrb[0].mxu0
      %558 = vdwg.mxu0
      %v559 = vld [vmem:[#allocation7 + $0x10] sm:$0xff]
      %v560 = vld [vmem:[#allocation7 + $0x28] sm:$0xff]
      %v561 = vld [vmem:[#allocation7 + $0x40] sm:$0xff]
      %v562 = vld [vmem:[#allocation7 + $0x58] sm:$0xff]
      %v563 = vld [vmem:[#allocation7 + $0x70] sm:$0xff]
      %v564 = vld [vmem:[#allocation7 + $0x88] sm:$0xff]
      %v565 = vld [vmem:[#allocation7 + $0xa0] sm:$0xff]
      %v566 = vld [vmem:[#allocation7 + $0xb8] sm:$0xff]
      %v567 = vld [vmem:[#allocation7 + $0xd0] sm:$0xff]
      %v568 = vld [vmem:[#allocation7 + $0xe8] sm:$0xff]
      %v569 = vld [vmem:[#allocation7 + $0x100] sm:$0xff]
      %v570 = vld [vmem:[#allocation7 + $0x118] sm:$0xff]
      %v571 = vld [vmem:[#allocation7 + $0x130] sm:$0xff]
      %v572 = vld [vmem:[#allocation7 + $0x148] sm:$0xff]
      %v573 = vld [vmem:[#allocation7 + $0x160] sm:$0xff]
      %v574 = vld [vmem:[#allocation7 + $0x178] sm:$0xff]
      %v576 = vlaneseq
      %v577 = vshrl.u32 %v576, 7
      %v578 = vsub.s32 0, %v577
      %v579 = vrot.slane %v93, %v578
      %581 = vmatprep.subr.mxu0 0.0
      %582 = vmatpush1.msra.mxu0 %v559
      %583 = vmatprep.subr.mxu0 0.0
      %584 = vmatpush1.msra.mxu0 %v560
      %585 = vmatprep.subr.mxu0 0.0
      %586 = vmatpush1.msra.mxu0 %v561
      %587 = vmatprep.subr.mxu0 0.0
      %588 = vmatpush1.msra.mxu0 %v562
      %589 = vmatprep.subr.mxu0 0.0
      %590 = vmatpush1.msra.mxu0 %v563
      %591 = vmatprep.subr.mxu0 0.0
      %592 = vmatpush1.msra.mxu0 %v564
      %593 = vmatprep.subr.mxu0 0.0
      %594 = vmatpush1.msra.mxu0 %v565
      %595 = vmatprep.subr.mxu0 0.0
      %596 = vmatpush1.msra.mxu0 %v566
      %597 = vmatprep.subr.mxu0 0.0
      %598 = vmatpush1.msra.mxu0 %v567
      %599 = vmatprep.subr.mxu0 0.0
      %600 = vmatpush1.msra.mxu0 %v568
      %601 = vmatprep.subr.mxu0 0.0
      %602 = vmatpush1.msra.mxu0 %v569
      %603 = vmatprep.subr.mxu0 0.0
      %604 = vmatpush1.msra.mxu0 %v570
      %605 = vmatprep.subr.mxu0 0.0
      %606 = vmatpush1.msra.mxu0 %v571
      %607 = vmatprep.subr.mxu0 0.0
      %608 = vmatpush1.msra.mxu0 %v572
      %609 = vmatprep.subr.mxu0 0.0
      %610 = vmatpush1.msra.mxu0 %v573
      %611 = vmatprep.subr.mxu0 0.0
      %612 = vmatpush1.msra.mxu0 %v574
      %613 = vmatprep.subr.mxu0 0.0
      %614 = vmatpush1.msra.mxu0 0.0
      %615 = vmatprep.subr.mxu0 0.0
      %616 = vmatpush1.msra.mxu0 0.0
      %617 = vmatprep.subr.mxu0 0.0
      %618 = vmatpush1.msra.mxu0 0.0
      %619 = vmatprep.subr.mxu0 0.0
      %620 = vmatpush1.msra.mxu0 0.0
      %621 = vmatprep.subr.mxu0 0.0
      %622 = vmatpush1.msra.mxu0 0.0
      %623 = vmatprep.subr.mxu0 0.0
      %624 = vmatpush1.msra.mxu0 0.0
      %625 = vmatprep.subr.mxu0 0.0
      %626 = vmatpush1.msra.mxu0 0.0
      %627 = vmatprep.subr.mxu0 0.0
      %628 = vmatpush1.msra.mxu0 0.0
      %629 = vmatprep.subr.mxu0 0.0
      %630 = vmatpush1.msra.mxu0 0.0
      %631 = vmatprep.subr.mxu0 0.0
      %632 = vmatpush1.msra.mxu0 0.0
      %633 = vmatprep.subr.mxu0 0.0
      %634 = vmatpush1.msra.mxu0 0.0
      %635 = vmatprep.subr.mxu0 0.0
      %636 = vmatpush1.msra.mxu0 0.0
      %637 = vmatprep.subr.mxu0 0.0
      %638 = vmatpush1.msra.mxu0 0.0
      %639 = vmatprep.subr.mxu0 0.0
      %640 = vmatpush1.msra.mxu0 0.0
      %641 = vmatprep.subr.mxu0 0.0
      %642 = vmatpush1.msra.mxu0 0.0
      %643 = vmatprep.subr.mxu0 0.0
      %644 = vmatpush1.msra.mxu0 0.0
      %645 = vmatprep.mubr.f32.mxu0 0.0
      %646 = vmatmul.mubr.f32.gmra.mrb[0].mxu0 %v483
      %v647 = vpop.f32.mrb[0].mxu0
      %v648 = vadd.f32 %v579, %v647
      %v649 = vpop.f32.mrb[0].mxu0
      %650 = vmatprep.mubr.f32.mxu0 0.0
      %651 = vmatmul.mubr.f32.gmra.mrb[0].mxu0 %v556
      %v652 = vpop.f32.mrb[0].mxu0
      %v653 = vadd.f32 %v579, %v652
      %v654 = vpop.f32.mrb[0].mxu0
      %655 = vdwg.mxu0
      %v656 = vtanh.pop %v648
      %v657 = vtanh.pop %v653
      %v658 = vld [vmem:[#allocation8] sm:$0xff]
      %v659 = vld [vmem:[#allocation8 + $0x8] sm:$0xff]
      %v660 = vld [vmem:[#allocation8 + $0x10] sm:$0xff]
      %v661 = vld [vmem:[#allocation8 + $0x18] sm:$0xff]
      %v662 = vld [vmem:[#allocation8 + $0x20] sm:$0xff]
      %v663 = vld [vmem:[#allocation8 + $0x28] sm:$0xff]
      %v664 = vld [vmem:[#allocation8 + $0x30] sm:$0xff]
      %v665 = vld [vmem:[#allocation8 + $0x38] sm:$0xff]
      %v666 = vld [vmem:[#allocation8 + $0x40] sm:$0xff]
      %v667 = vld [vmem:[#allocation8 + $0x48] sm:$0xff]
      %v668 = vld [vmem:[#allocation8 + $0x50] sm:$0xff]
      %v669 = vld [vmem:[#allocation8 + $0x58] sm:$0xff]
      %v670 = vld [vmem:[#allocation8 + $0x60] sm:$0xff]
      %v671 = vld [vmem:[#allocation8 + $0x68] sm:$0xff]
      %v672 = vld [vmem:[#allocation8 + $0x70] sm:$0xff]
      %v673 = vld [vmem:[#allocation8 + $0x78] sm:$0xff]
      %v674 = vtanh.pop %v210
      %v675 = vtanh.pop %v211
      %v676 = vld [vmem:[#allocation8 + $0x80] sm:$0xff]
      %v677 = vld [vmem:[#allocation8 + $0x88] sm:$0xff]
      %v678 = vld [vmem:[#allocation8 + $0x90] sm:$0xff]
      %v679 = vld [vmem:[#allocation8 + $0x98] sm:$0xff]
      %v680 = vld [vmem:[#allocation8 + $0xa0] sm:$0xff]
      %v681 = vld [vmem:[#allocation8 + $0xa8] sm:$0xff]
      %v682 = vld [vmem:[#allocation8 + $0xb0] sm:$0xff]
      %v683 = vld [vmem:[#allocation8 + $0xb8] sm:$0xff]
      %v684 = vld [vmem:[#allocation8 + $0xc0] sm:$0xff]
      %v685 = vld [vmem:[#allocation8 + $0xc8] sm:$0xff]
      %v686 = vld [vmem:[#allocation8 + $0xd0] sm:$0xff]
      %v687 = vld [vmem:[#allocation8 + $0xd8] sm:$0xff]
      %v688 = vld [vmem:[#allocation8 + $0xe0] sm:$0xff]
      %v689 = vld [vmem:[#allocation8 + $0xe8] sm:$0xff]
      %v690 = vld [vmem:[#allocation8 + $0xf0] sm:$0xff]
      %v691 = vld [vmem:[#allocation8 + $0xf8] sm:$0xff]
      %692 = vmatprep.subr.mxu0 0.0
      %693 = vmatpush1.msra.mxu0 %v676
      %694 = vmatprep.subr.mxu0 0.0
      %695 = vmatpush1.msra.mxu0 %v677
      %696 = vmatprep.subr.mxu0 0.0
      %697 = vmatpush1.msra.mxu0 %v678
      %698 = vmatprep.subr.mxu0 0.0
      %699 = vmatpush1.msra.mxu0 %v679
      %700 = vmatprep.subr.mxu0 0.0
      %701 = vmatpush1.msra.mxu0 %v680
      %702 = vmatprep.subr.mxu0 0.0
      %703 = vmatpush1.msra.mxu0 %v681
      %704 = vmatprep.subr.mxu0 0.0
      %705 = vmatpush1.msra.mxu0 %v682
      %706 = vmatprep.subr.mxu0 0.0
      %707 = vmatpush1.msra.mxu0 %v683
      %708 = vmatprep.subr.mxu0 0.0
      %709 = vmatpush1.msra.mxu0 %v684
      %710 = vmatprep.subr.mxu0 0.0
      %711 = vmatpush1.msra.mxu0 %v685
      %712 = vmatprep.subr.mxu0 0.0
      %713 = vmatpush1.msra.mxu0 %v686
      %714 = vmatprep.subr.mxu0 0.0
      %715 = vmatpush1.msra.mxu0 %v687
      %716 = vmatprep.subr.mxu0 0.0
      %717 = vmatpush1.msra.mxu0 %v688
      %718 = vmatprep.subr.mxu0 0.0
      %719 = vmatpush1.msra.mxu0 %v689
      %720 = vmatprep.subr.mxu0 0.0
      %721 = vmatpush1.msra.mxu0 %v690
      %722 = vmatprep.subr.mxu0 0.0
      %723 = vmatpush1.msra.mxu0 %v691
      %724 = vmatprep.subr.mxu0 0.0
      %725 = vmatpush1.msra.mxu0 0.0
      %726 = vmatprep.subr.mxu0 0.0
      %727 = vmatpush1.msra.mxu0 0.0
      %728 = vmatprep.subr.mxu0 0.0
      %729 = vmatpush1.msra.mxu0 0.0
      %730 = vmatprep.subr.mxu0 0.0
      %731 = vmatpush1.msra.mxu0 0.0
      %732 = vmatprep.subr.mxu0 0.0
      %733 = vmatpush1.msra.mxu0 0.0
      %734 = vmatprep.subr.mxu0 0.0
      %735 = vmatpush1.msra.mxu0 0.0
      %736 = vmatprep.subr.mxu0 0.0
      %737 = vmatpush1.msra.mxu0 0.0
      %738 = vmatprep.subr.mxu0 0.0
      %739 = vmatpush1.msra.mxu0 0.0
      %740 = vmatprep.subr.mxu0 0.0
      %741 = vmatpush1.msra.mxu0 0.0
      %742 = vmatprep.subr.mxu0 0.0
      %743 = vmatpush1.msra.mxu0 0.0
      %744 = vmatprep.subr.mxu0 0.0
      %745 = vmatpush1.msra.mxu0 0.0
      %746 = vmatprep.subr.mxu0 0.0
      %747 = vmatpush1.msra.mxu0 0.0
      %748 = vmatprep.subr.mxu0 0.0
      %749 = vmatpush1.msra.mxu0 0.0
      %750 = vmatprep.subr.mxu0 0.0
      %751 = vmatpush1.msra.mxu0 0.0
      %752 = vmatprep.subr.mxu0 0.0
      %753 = vmatpush1.msra.mxu0 0.0
      %754 = vmatprep.subr.mxu0 0.0
      %755 = vmatpush1.msra.mxu0 0.0
      %756 = vmatprep.mubr.f32.mxu0 0.0
      %757 = vmatmul.mubr.f32.gmra.mrb[0].mxu0 %v674
      %v758 = vpop.f32.mrb[0].mxu0
      %v759 = vadd.f32 0.0, %v758
      %v760 = vpop.f32.mrb[0].mxu0
      %761 = vmatprep.mubr.f32.mxu0 0.0
      %762 = vmatmul.mubr.f32.gmra.mrb[0].mxu0 %v675
      %v763 = vpop.f32.mrb[0].mxu0
      %v764 = vadd.f32 0.0, %v763
      %v765 = vpop.f32.mrb[0].mxu0
      %766 = vdwg.mxu0
      %767 = vmatprep.subr.mxu0 0.0
      %768 = vmatpush1.msra.mxu0 %v658
      %769 = vmatprep.subr.mxu0 0.0
      %770 = vmatpush1.msra.mxu0 %v659
      %771 = vmatprep.subr.mxu0 0.0
      %772 = vmatpush1.msra.mxu0 %v660
      %773 = vmatprep.subr.mxu0 0.0
      %774 = vmatpush1.msra.mxu0 %v661
      %775 = vmatprep.subr.mxu0 0.0
      %776 = vmatpush1.msra.mxu0 %v662
      %777 = vmatprep.subr.mxu0 0.0
      %778 = vmatpush1.msra.mxu0 %v663
      %779 = vmatprep.subr.mxu0 0.0
      %780 = vmatpush1.msra.mxu0 %v664
      %781 = vmatprep.subr.mxu0 0.0
      %782 = vmatpush1.msra.mxu0 %v665
      %783 = vmatprep.subr.mxu0 0.0
      %784 = vmatpush1.msra.mxu0 %v666
      %785 = vmatprep.subr.mxu0 0.0
      %786 = vmatpush1.msra.mxu0 %v667
      %787 = vmatprep.subr.mxu0 0.0
      %788 = vmatpush1.msra.mxu0 %v668
      %789 = vmatprep.subr.mxu0 0.0
      %790 = vmatpush1.msra.mxu0 %v669
      %791 = vmatprep.subr.mxu0 0.0
      %792 = vmatpush1.msra.mxu0 %v670
      %793 = vmatprep.subr.mxu0 0.0
      %794 = vmatpush1.msra.mxu0 %v671
      %795 = vmatprep.subr.mxu0 0.0
      %796 = vmatpush1.msra.mxu0 %v672
      %797 = vmatprep.subr.mxu0 0.0
      %798 = vmatpush1.msra.mxu0 %v673
      %799 = vmatprep.subr.mxu0 0.0
      %800 = vmatpush1.msra.mxu0 0.0
      %801 = vmatprep.subr.mxu0 0.0
      %802 = vmatpush1.msra.mxu0 0.0
      %803 = vmatprep.subr.mxu0 0.0
      %804 = vmatpush1.msra.mxu0 0.0
      %805 = vmatprep.subr.mxu0 0.0
      %806 = vmatpush1.msra.mxu0 0.0
      %807 = vmatprep.subr.mxu0 0.0
      %808 = vmatpush1.msra.mxu0 0.0
      %809 = vmatprep.subr.mxu0 0.0
      %810 = vmatpush1.msra.mxu0 0.0
      %811 = vmatprep.subr.mxu0 0.0
      %812 = vmatpush1.msra.mxu0 0.0
      %813 = vmatprep.subr.mxu0 0.0
      %814 = vmatpush1.msra.mxu0 0.0
      %815 = vmatprep.subr.mxu0 0.0
      %816 = vmatpush1.msra.mxu0 0.0
      %817 = vmatprep.subr.mxu0 0.0
      %818 = vmatpush1.msra.mxu0 0.0
      %819 = vmatprep.subr.mxu0 0.0
      %820 = vmatpush1.msra.mxu0 0.0
      %821 = vmatprep.subr.mxu0 0.0
      %822 = vmatpush1.msra.mxu0 0.0
      %823 = vmatprep.subr.mxu0 0.0
      %824 = vmatpush1.msra.mxu0 0.0
      %825 = vmatprep.subr.mxu0 0.0
      %826 = vmatpush1.msra.mxu0 0.0
      %827 = vmatprep.subr.mxu0 0.0
      %828 = vmatpush1.msra.mxu0 0.0
      %829 = vmatprep.subr.mxu0 0.0
      %830 = vmatpush1.msra.mxu0 0.0
      %831 = vmatprep.mubr.f32.mxu0 0.0
      %832 = vmatmul.mubr.f32.gmra.mrb[0].mxu0 %v656
      %v833 = vpop.f32.mrb[0].mxu0
      %v834 = vadd.f32 %v759, %v833
      %v835 = vpop.f32.mrb[0].mxu0
      %836 = vmatprep.mubr.f32.mxu0 0.0
      %837 = vmatmul.mubr.f32.gmra.mrb[0].mxu0 %v657
      %v838 = vpop.f32.mrb[0].mxu0
      %v839 = vadd.f32 %v764, %v838
      %v840 = vpop.f32.mrb[0].mxu0
      %841 = vdwg.mxu0
      %v843 = vlaneseq
      %v844 = vshrl.u32 %v843, 7
      %v845 = vsub.s32 0, %v844
      %v846 = vrot.slane %v94, %v845
      %v848 = vadd.f32 %v834, %v846
      %v849 = vadd.f32 %v839, %v846
      %v850 = vlaneseq
      %v851 = vshrl.u32 %v850, 7
      %v852 = vld [vmem:[%s3] sm:$0x1]
      %v853 = vld [vmem:[%s3 + $0x1] sm:$0x1]
      %v854 = vlaneseq
      %v855 = vshrl.u32 %v854, 7
      %v856 = vsub.s32 0, %v855
      %v857 = vrot.slane %v852, %v856
      %v858 = vlaneseq
      %v859 = vshrl.u32 %v858, 7
      %v860 = vsub.s32 0, %v859
      %v861 = vrot.slane %v853, %v860
      %vm862 = vcmp.lt.s32.totalorder %v851, %v857
      %vm863 = vcmp.lt.s32.totalorder %v851, %v861
      %v864 = vsel %vm862, 1, 0
      %v865 = vsel %vm863, 1, 0
      %866 = vset.pattern.permute.xlu0 0
      %867 = vperm.xlu0 %866, %v864
      %v868 = vpop.permute.xlu0 %867
      %869 = vset.pattern.permute.xlu0 0
      %870 = vperm.xlu0 %869, %v865
      %v871 = vpop.permute.xlu0 %870
      %vm872 = vcmp.eq.s32.totalorder %v868, 1
      %vm873 = vcmp.eq.s32.totalorder %v871, 1
      %v874 = vsel %vm872, %v848, -1e+10
      %v875 = vsel %vm873, %v849, -1e+10
      %876 = vst [vmem:[#allocation10] sm:$0xff] %v874
      %877 = vst [vmem:[#allocation10 + $0x8] sm:$0xff] %v875
    $region49: #{tpu_custom_call.1} parent=1 // pred_fallthru
      _
    // Predicated region
    $region50: #{tpu_custom_call.1} parent=1 // pred_check
      _
    $region51: #{tpu_custom_call.1} parent=1 // pred_check_branch
      %879 = sbr.rel (0) target = $region53
    $region52: #{tpu_custom_call.1} parent=1 // pred_region
      %s881 = ssub.s32 256, 256
      %882 = vsyncadd [#allocation4], %s881
      %s883 = sshll.u32 [#allocation10], 4
      %s884 = int_to_ptr.vmem [resolvable:$true] %s883
      %889 = dma.vmem_to_hbm [thread:$0]  %s884, 256, %s7, [#allocation4], 128, 128, 8
    $region53: #{tpu_custom_call.1} parent=1 // pred_fallthru
      _
    // Predicated region
    $region54: #{tpu_custom_call.1} parent=1 // pred_check
      _
    $region55: #{tpu_custom_call.1} parent=1 // pred_check_branch
      %891 = sbr.rel (0) target = $region57
    $region56: #{tpu_custom_call.1} parent=1 // pred_region
      %892 = dma.done [#allocation4], 256
    $region57: #{tpu_custom_call.1} parent=1 // pred_fallthru
      _
    %893 = vsyncpa [#allocation3], 1
    %894 = vsyncpa [#allocation6], 1
    %895 = vsyncpa [#allocation9], 1
    %896 = vsyncpa [#allocation4], 1

</llo_original>
